<compile_context>
chip_gen: v7x
topology: tpu7x:2x2x1
jax: 0.10.0
libtpu: 0.0.40
codegen_flags: <defaults>
</compile_context>

<pallas_src>
import jax
import jax.numpy as jnp
import numpy as np
from jax.experimental import pallas as pl
from jax.experimental.pallas import tpu as pltpu


# ----------------------------- Pallas kernel --------------------------------
def _mlp_multi_kernel(tid_ref, x_ref, w1_ref, b1_ref, w2_ref, b2_ref, o_ref):
    # tid_ref: int32[1] in SMEM (scalar prefetch; consumed by the index_maps, unused here)
    # x_ref : [B, D] bf16  (flattened input, pre-cast in the wrapper)
    # w1_ref: [D, H] bf16  (fc1 weight, pre-transposed)
    # b1_ref: [1, H] f32
    # w2_ref: [H, O] bf16  (selected task head weight, head dim squeezed out)
    # b2_ref: [1, O] f32   (selected task head bias, head dim squeezed out)
    # o_ref : [B, O] f32
    del tid_ref
    h = jnp.dot(x_ref[...], w1_ref[...], preferred_element_type=jnp.float32)
    h = jnp.maximum(h + b1_ref[...], 0.0)            # f32 epilogue (don't regress on v5e)
    out = jnp.dot(h.astype(jnp.bfloat16), w2_ref[...],
                  preferred_element_type=jnp.float32)
    o_ref[...] = (out + b2_ref[...]).astype(o_ref.dtype)


def mlp_multi_pallas(task_id, x_flat, w1_t, b1, heads_w_t, heads_b):
    """Fused fc1 -> relu -> head matmul; head selected in-kernel via scalar prefetch."""
    B, D = x_flat.shape
    H = w1_t.shape[1]
    n_heads, _, O = heads_w_t.shape

    flops = 2 * B * D * H + 2 * B * H * O
    bytes_accessed = (B * D * 2 + D * H * 2 + H * 4   # x (bf16), w1 (bf16), b1
                      + H * O * 2 + O * 4             # selected head w (bf16), b
                      + B * O * 4)                    # output

    return pl.pallas_call(
        _mlp_multi_kernel,
        out_shape=jax.ShapeDtypeStruct((B, O), jnp.float32),
        grid_spec=pltpu.PrefetchScalarGridSpec(
            num_scalar_prefetch=1,          # task_id
            grid=(1,),
            in_specs=[
                pl.BlockSpec((B, D), lambda i, tid: (0, 0)),
                pl.BlockSpec((D, H), lambda i, tid: (0, 0)),
                pl.BlockSpec((1, H), lambda i, tid: (0, 0)),
                # Head operands: leading task dim squeezed; index_map picks the tid block.
                pl.BlockSpec((pl.Squeezed(), H, O), lambda i, tid: (tid[0], 0, 0)),
                pl.BlockSpec((pl.Squeezed(), 1, O), lambda i, tid: (tid[0], 0, 0)),
            ],
            out_specs=pl.BlockSpec((B, O), lambda i, tid: (0, 0)),
        ),
        compiler_params=pltpu.CompilerParams(
            dimension_semantics=("arbitrary",),
        ),
        cost_estimate=pl.CostEstimate(flops=flops, transcendentals=0,
                                      bytes_accessed=bytes_accessed),
    )(task_id, x_flat, w1_t, b1, heads_w_t, heads_b)


# ----------------------------- parameter setup -------------------------------
def init_mlp_multi_params(key, input_size, hidden_size, n_classes,
                          num_tasks=5, multi_head=True):
    """Torch-like nn.Linear init U(-1/sqrt(fan_in), 1/sqrt(fan_in)); weights stored
    pre-transposed (one-time cost) and in bf16 so the forward path has zero layout ops."""
    assert n_classes % num_tasks == 0, "n_classes must be divisible by num_tasks"
    head_out = n_classes // num_tasks if multi_head else n_classes
    n_heads = num_tasks if multi_head else 1

    k1, k2, k3, k4 = jax.random.split(key, 4)
    bound1 = 1.0 / np.sqrt(input_size)
    fc1_w = jax.random.uniform(k1, (hidden_size, input_size), jnp.float32,
                               minval=-bound1, maxval=bound1)
    fc1_b = jax.random.uniform(k2, (hidden_size,), jnp.float32,
                               minval=-bound1, maxval=bound1)

    bound2 = 1.0 / np.sqrt(hidden_size)
    heads_w = jax.random.uniform(k3, (n_heads, head_out, hidden_size), jnp.float32,
                                 minval=-bound2, maxval=bound2)
    heads_b = jax.random.uniform(k4, (n_heads, head_out), jnp.float32,
                                 minval=-bound2, maxval=bound2)

    return {
        "fc1_w_t": fc1_w.T.astype(jnp.bfloat16),                              # [D, H]
        "fc1_b": fc1_b[None, :],                                              # [1, H] f32
        "heads_w_t": jnp.transpose(heads_w, (0, 2, 1)).astype(jnp.bfloat16),  # [nH, H, O]
        "heads_b": heads_b[:, None, :],                                       # [nH, 1, O] f32
    }


@jax.jit
def mlp_multi_forward(params, x, task_id):
    """Matches MLP_multi.forward: x.view(B, -1) -> fc1 -> relu -> task_classifiers[task_id].

    The reshape + bf16 cast is cheap glue fused under jit; bf16 halves the activation
    HBM->VMEM stream (the dominant byte stream once B grows past the fixed w1 bytes).
    """
    B = x.shape[0]
    x_flat = x.reshape(B, -1).astype(jnp.bfloat16)
    return mlp_multi_pallas(task_id, x_flat,
                            params["fc1_w_t"], params["fc1_b"],
                            params["heads_w_t"], params["heads_b"])


# ----------------------------------- main ------------------------------------
if __name__ == "__main__":
    # NCHW input [2, 4, 16, 16] -> input_size = 1024, hidden = 32, 5 tasks x 2 classes.
    B, C, H_sp, W_sp = 2, 4, 16, 16
    input_size = C * H_sp * W_sp
    hidden_size = 32
    n_classes = 10
    num_tasks = 5
    multi_head = True
    task = 2

    key = jax.random.PRNGKey(0)
    kx, kp = jax.random.split(key)
    x = jax.random.normal(kx, (B, C, H_sp, W_sp), jnp.float32)
    params = init_mlp_multi_params(kp, input_size, hidden_size, n_classes,
                                   num_tasks=num_tasks, multi_head=multi_head)

    task_id = jnp.array([task], dtype=jnp.int32)
    out = mlp_multi_forward(params, x, task_id)
    out = jax.block_until_ready(out)

    # Silent correctness check against a plain-JAX reference of the same math
    # (bf16 weights/activations into the MXU, f32 accumulation, f32 epilogue).
    x_flat = x.reshape(B, -1).astype(jnp.bfloat16)
    h_ref = jnp.dot(x_flat, params["fc1_w_t"],
                    preferred_element_type=jnp.float32) + params["fc1_b"]
    h_ref = jnp.maximum(h_ref, 0.0)
    ref = jnp.dot(h_ref.astype(jnp.bfloat16), params["heads_w_t"][task],
                  preferred_element_type=jnp.float32) + params["heads_b"][task]
    np.testing.assert_allclose(np.asarray(out), np.asarray(ref), rtol=5e-3, atol=5e-3)

    print("KERNEL_OK")
</pallas_src>

<mosaic_0001>
module attributes {stable_mosaic.version = 11 : i64} {
  func.func @_mlp_multi_kernel(%arg0: i32, %arg1: memref<1xi32, #tpu.memory_space<smem>>, %arg2: memref<2x1024xbf16, #tpu.memory_space<vmem>>, %arg3: memref<1024x32xbf16, #tpu.memory_space<vmem>>, %arg4: memref<1x32xf32, #tpu.memory_space<vmem>>, %arg5: memref<1x32x2xbf16, #tpu.memory_space<vmem>>, %arg6: memref<1x1x2xf32, #tpu.memory_space<vmem>>, %arg7: memref<2x2xf32, #tpu.memory_space<vmem>>) attributes {dimension_semantics = [#tpu.dimension_semantics<arbitrary>], iteration_bounds = array<i64: 1>, scalar_prefetch = 1 : i64, scratch_operands = 0 : i64, tpu.core_type = #tpu.core_type<tc>, window_params = [{pipeline_mode = #tpu.pipeline_mode<synchronous>, transform_indices = @transform_0, window_bounds = array<i64: 2, 1024>}, {pipeline_mode = #tpu.pipeline_mode<synchronous>, transform_indices = @transform_1, window_bounds = array<i64: 1024, 32>}, {pipeline_mode = #tpu.pipeline_mode<synchronous>, transform_indices = @transform_2, window_bounds = array<i64: 1, 32>}, {transform_indices = @transform_3, window_bounds = array<i64: 1, 32, 2>}, {transform_indices = @transform_4, window_bounds = array<i64: 1, 1, 2>}, {pipeline_mode = #tpu.pipeline_mode<synchronous>, transform_indices = @transform_5, window_bounds = array<i64: 2, 2>}]} {
    %c0 = arith.constant 0 : index
    %c0_0 = arith.constant 0 : index
    %0 = vector.load %arg2[%c0, %c0_0] : memref<2x1024xbf16, #tpu.memory_space<vmem>>, vector<2x1024xbf16>
    %c0_1 = arith.constant 0 : index
    %c0_2 = arith.constant 0 : index
    %1 = vector.load %arg3[%c0_1, %c0_2] : memref<1024x32xbf16, #tpu.memory_space<vmem>>, vector<1024x32xbf16>
    %cst = arith.constant dense<0.000000e+00> : vector<2x32xf32>
    %2 = tpu.matmul %0, %1, %cst {dimension_numbers = #tpu.dot_dimension_numbers<[1], [0], [0], [1], [0, 0, 1, 1], [], []>} : vector<2x1024xbf16>, vector<1024x32xbf16>, vector<2x32xf32> -> vector<2x32xf32>
    %c0_3 = arith.constant 0 : index
    %c0_4 = arith.constant 0 : index
    %3 = vector.load %arg4[%c0_3, %c0_4] : memref<1x32xf32, #tpu.memory_space<vmem>>, vector<1x32xf32>
    %4 = vector.broadcast %3 : vector<1x32xf32> to vector<2x32xf32>
    %5 = arith.addf %2, %4 : vector<2x32xf32>
    %cst_5 = arith.constant 0.000000e+00 : f32
    %6 = vector.broadcast %cst_5 : f32 to vector<2x32xf32>
    %7 = arith.maximumf %5, %6 : vector<2x32xf32>
    %8 = arith.truncf %7 : vector<2x32xf32> to vector<2x32xbf16>
    %c0_6 = arith.constant 0 : index
    %c0_7 = arith.constant 0 : index
    %c0_8 = arith.constant 0 : index
    %9 = vector.load %arg5[%c0_6, %c0_7, %c0_8] : memref<1x32x2xbf16, #tpu.memory_space<vmem>>, vector<1x32x2xbf16>
    %10 = vector.shape_cast %9 : vector<1x32x2xbf16> to vector<32x2xbf16>
    %cst_9 = arith.constant dense<0.000000e+00> : vector<2x2xf32>
    %11 = tpu.matmul %8, %10, %cst_9 {dimension_numbers = #tpu.dot_dimension_numbers<[1], [0], [0], [1], [0, 0, 1, 1], [], []>} : vector<2x32xbf16>, vector<32x2xbf16>, vector<2x2xf32> -> vector<2x2xf32>
    %c0_10 = arith.constant 0 : index
    %c0_11 = arith.constant 0 : index
    %c0_12 = arith.constant 0 : index
    %12 = vector.load %arg6[%c0_10, %c0_11, %c0_12] : memref<1x1x2xf32, #tpu.memory_space<vmem>>, vector<1x1x2xf32>
    %13 = vector.shape_cast %12 : vector<1x1x2xf32> to vector<1x2xf32>
    %14 = vector.broadcast %13 : vector<1x2xf32> to vector<2x2xf32>
    %15 = arith.addf %11, %14 : vector<2x2xf32>
    %c0_13 = arith.constant 0 : index
    %c0_14 = arith.constant 0 : index
    %16 = vector.load %arg7[%c0_13, %c0_14] : memref<2x2xf32, #tpu.memory_space<vmem>>, vector<2x2xf32>
    tpu.vector_store %arg7[%c0_13, %c0_14], %15 {strides = array<i32>} : memref<2x2xf32, #tpu.memory_space<vmem>>, vector<2x2xf32>,
    return
  }
  func.func @transform_0(%arg0: i32, %arg1: memref<1xi32, #tpu.memory_space<smem>>) -> (i32, i32) {
    %c0_i32 = arith.constant 0 : i32
    %c0_i32_0 = arith.constant 0 : i32
    %c0_i32_1 = arith.constant 0 : i32
    return %c0_i32, %c0_i32_0 : i32, i32
  }
  func.func @transform_1(%arg0: i32, %arg1: memref<1xi32, #tpu.memory_space<smem>>) -> (i32, i32) {
    %c0_i32 = arith.constant 0 : i32
    %c0_i32_0 = arith.constant 0 : i32
    %c0_i32_1 = arith.constant 0 : i32
    return %c0_i32, %c0_i32_0 : i32, i32
  }
  func.func @transform_2(%arg0: i32, %arg1: memref<1xi32, #tpu.memory_space<smem>>) -> (i32, i32) {
    %c0_i32 = arith.constant 0 : i32
    %c0_i32_0 = arith.constant 0 : i32
    %c0_i32_1 = arith.constant 0 : i32
    return %c0_i32, %c0_i32_0 : i32, i32
  }
  func.func @transform_3(%arg0: i32, %arg1: memref<1xi32, #tpu.memory_space<smem>>) -> (i32, i32, i32) {
    %c0 = arith.constant 0 : index
    %0 = memref.load %arg1[%c0] : memref<1xi32, #tpu.memory_space<smem>>
    %c0_i32 = arith.constant 0 : i32
    %c0_i32_0 = arith.constant 0 : i32
    %c0_i32_1 = arith.constant 0 : i32
    return %0, %c0_i32, %c0_i32_0 : i32, i32, i32
  }
  func.func @transform_4(%arg0: i32, %arg1: memref<1xi32, #tpu.memory_space<smem>>) -> (i32, i32, i32) {
    %c0 = arith.constant 0 : index
    %0 = memref.load %arg1[%c0] : memref<1xi32, #tpu.memory_space<smem>>
    %c0_i32 = arith.constant 0 : i32
    %c0_i32_0 = arith.constant 0 : i32
    %c0_i32_1 = arith.constant 0 : i32
    return %0, %c0_i32, %c0_i32_0 : i32, i32, i32
  }
  func.func @transform_5(%arg0: i32, %arg1: memref<1xi32, #tpu.memory_space<smem>>) -> (i32, i32) {
    %c0_i32 = arith.constant 0 : i32
    %c0_i32_0 = arith.constant 0 : i32
    %c0_i32_1 = arith.constant 0 : i32
    return %c0_i32, %c0_i32_0 : i32, i32
  }
}

</mosaic_0001>

<llo_original>
// kernel: mlp_multi_forward.1
$region0: #{mlp_multi_forward.1}
  #allocation0 [shape = 'u32[]', space=smem, size = 0x4, offset = 0x4, fixed_abs, tag = 'smem constant byte address 0x4 - core index']
  #allocation1 [shape = 'u32[144,128]{1,0:T(1,128)}', space=vmem, size = 0x12000, scoped, tag = 'internal scratch']
  #allocation2 [shape = 's32[1]{0}', space=sflag, size = 0x4, scoped, tag = 'scoped memory for mlp_multi_forward.1']
  #allocation3 [shape = 's32[1]{0:T(128)S(6)}', space=smem, size = 0x200, scoped, tag = 'prefetched SMEM operand 0']
  %s0 = inlined_call_operand.<no memory space> [shape: s32[1], index: 0, kind: input, shape index: {}]
  %s1 = inlined_call_operand.vmem [shape: bf16[2,1024], index: 1, kind: input, shape index: {}]
  %s2 = inlined_call_operand.vmem [shape: bf16[1024,32], index: 2, kind: input, shape index: {}]
  %s3 = inlined_call_operand.vmem [shape: f32[1,32], index: 3, kind: input, shape index: {}]
  %s4 = inlined_call_operand.vmem [shape: bf16[5,32,2], index: 4, kind: input, shape index: {}]
  %s5 = inlined_call_operand.vmem [shape: f32[5,1,2], index: 5, kind: input, shape index: {}]
  %s6 = inlined_call_operand.hbm [shape: f32[2,2], index: 6, kind: output, shape index: {}]
  %s7 = sld [smem:[#allocation0]]
  $region30: #{mlp_multi_forward.1} parent=0
    _
  %s9 = ssub.s32 1, %s7
  %s10 = scalar_select 0, %s9, %s7
  %11 = sst [smem:[#allocation3]] %s0
  $region1: #{mlp_multi_forward.1} parent=0
    #allocation4 [shape = 'u8[1024]{0}', space=vmem, size = 0x400, scoped, tag = 'output window, operand 0, single buffered']
    #allocation5 [shape = 's32[1]{0}', space=sflag, size = 0x4, scoped, tag = 'scoped memory for mlp_multi_forward.1']
    %12 = vsyncpa [#allocation5], 0
    // Predicated region
    $region2: #{mlp_multi_forward.1} parent=1 // pred_check
      _
    $region3: #{mlp_multi_forward.1} parent=1 // pred_check_branch
      %14 = sbr.rel (0) target = $region5
    $region4: #{mlp_multi_forward.1} parent=1 // pred_region
      _
    $region5: #{mlp_multi_forward.1} parent=1 // pred_fallthru
      _
    // Predicated region
    $region6: #{mlp_multi_forward.1} parent=1 // pred_check
      _
    $region7: #{mlp_multi_forward.1} parent=1 // pred_check_branch
      %16 = sbr.rel (0) target = $region9
    $region8: #{mlp_multi_forward.1} parent=1 // pred_region
      _
    $region9: #{mlp_multi_forward.1} parent=1 // pred_fallthru
      _
    // Predicated region
    $region10: #{mlp_multi_forward.1} parent=1 // pred_check
      _
    $region11: #{mlp_multi_forward.1} parent=1 // pred_check_branch
      %18 = sbr.rel (0) target = $region13
    $region12: #{mlp_multi_forward.1} parent=1 // pred_region
      _
    $region13: #{mlp_multi_forward.1} parent=1 // pred_fallthru
      _
    // Predicated region
    $region14: #{mlp_multi_forward.1} parent=1 // pred_check
      _
    $region15: #{mlp_multi_forward.1} parent=1 // pred_check_branch
      %20 = sbr.rel (0) target = $region17
    $region16: #{mlp_multi_forward.1} parent=1 // pred_region
      %s21 = sld [smem:[#allocation3]]
      %p22 = scmp.lt.s32.totalorder %s21, 4
      %s23 = scalar_select %p22, %s21, 4
      %s24 = smul.addr %s23, 4
      %s25 = smul.addr %s24, 4
      %s26 = scalar_lea.vmem %s4, %s25
      %s27 = sld [smem:[#allocation3]]
    $region17: #{mlp_multi_forward.1} parent=1 // pred_fallthru
      _
    // Predicated region
    $region18: #{mlp_multi_forward.1} parent=1 // pred_check
      _
    $region19: #{mlp_multi_forward.1} parent=1 // pred_check_branch
      %29 = sbr.rel (0) target = $region21
    $region20: #{mlp_multi_forward.1} parent=1 // pred_region
      %s30 = sld [smem:[#allocation3]]
      %p31 = scmp.lt.s32.totalorder %s30, 4
      %s32 = scalar_select %p31, %s30, 4
      %s33 = scalar_lea.vmem %s5, %s32
      %s34 = sld [smem:[#allocation3]]
    $region21: #{mlp_multi_forward.1} parent=1 // pred_fallthru
      _
    %s35 = sld [smem:[#allocation3]]
    %p36 = scmp.lt.s32.totalorder %s35, 4
    %s37 = scalar_select %p36, %s35, 4
    %s38 = smul.addr %s37, 4
    %s39 = smul.addr %s38, 4
    %s40 = scalar_lea.vmem %s4, %s39
    %s41 = sld [smem:[#allocation3]]
    %p42 = scmp.lt.s32.totalorder %s41, 4
    %s43 = scalar_select %p42, %s41, 4
    %s44 = scalar_lea.vmem %s5, %s43
    %s45 = sld [smem:[#allocation3]]
    %p46 = scmp.lt.s32.totalorder %s45, 4
    %s47 = scalar_select %p46, %s45, 4
    %s48 = smul.addr %s47, 4
    %s49 = smul.addr %s48, 4
    %s50 = scalar_lea.vmem %s4, %s49
    %s51 = sld [smem:[#allocation3]]
    %s52 = sld [smem:[#allocation3]]
    %p53 = scmp.lt.s32.totalorder %s52, 4
    %s54 = scalar_select %p53, %s52, 4
    %s55 = scalar_lea.vmem %s5, %s54
    %s56 = sld [smem:[#allocation3]]
    %v58 = vld [vmem:[%s1] sm:$0xff]
    %v59 = vld [vmem:[%s2] sm:$0xf]
    %v60 = vld [vmem:[%s2 + $0x4] sm:$0xf]
    %v61 = vld [vmem:[%s2 + $0x8] sm:$0xf]
    %v62 = vld [vmem:[%s2 + $0xc] sm:$0xf]
    %v63 = vld [vmem:[%s2 + $0x10] sm:$0xf]
    %v64 = vld [vmem:[%s2 + $0x14] sm:$0xf]
    %v65 = vld [vmem:[%s2 + $0x18] sm:$0xf]
    %v66 = vld [vmem:[%s2 + $0x1c] sm:$0xf]
    %v67 = vld [vmem:[%s2 + $0x20] sm:$0xf]
    %v68 = vld [vmem:[%s2 + $0x24] sm:$0xf]
    %v69 = vld [vmem:[%s2 + $0x28] sm:$0xf]
    %v70 = vld [vmem:[%s2 + $0x2c] sm:$0xf]
    %v71 = vld [vmem:[%s2 + $0x30] sm:$0xf]
    %v72 = vld [vmem:[%s2 + $0x34] sm:$0xf]
    %v73 = vld [vmem:[%s2 + $0x38] sm:$0xf]
    %v74 = vld [vmem:[%s2 + $0x3c] sm:$0xf]
    %v75 = vld [vmem:[%s2 + $0x40] sm:$0xf]
    %v76 = vld [vmem:[%s2 + $0x44] sm:$0xf]
    %v77 = vld [vmem:[%s2 + $0x48] sm:$0xf]
    %v78 = vld [vmem:[%s2 + $0x4c] sm:$0xf]
    %v79 = vld [vmem:[%s2 + $0x50] sm:$0xf]
    %v80 = vld [vmem:[%s2 + $0x54] sm:$0xf]
    %v81 = vld [vmem:[%s2 + $0x58] sm:$0xf]
    %v82 = vld [vmem:[%s2 + $0x5c] sm:$0xf]
    %v83 = vld [vmem:[%s2 + $0x60] sm:$0xf]
    %v84 = vld [vmem:[%s2 + $0x64] sm:$0xf]
    %v85 = vld [vmem:[%s2 + $0x68] sm:$0xf]
    %v86 = vld [vmem:[%s2 + $0x6c] sm:$0xf]
    %v87 = vld [vmem:[%s2 + $0x70] sm:$0xf]
    %v88 = vld [vmem:[%s2 + $0x74] sm:$0xf]
    %v89 = vld [vmem:[%s2 + $0x78] sm:$0xf]
    %v90 = vld [vmem:[%s2 + $0x7c] sm:$0xf]
    %v91 = vld [vmem:[%s2 + $0x80] sm:$0xf]
    %v92 = vld [vmem:[%s2 + $0x84] sm:$0xf]
    %v93 = vld [vmem:[%s2 + $0x88] sm:$0xf]
    %v94 = vld [vmem:[%s2 + $0x8c] sm:$0xf]
    %v95 = vld [vmem:[%s2 + $0x90] sm:$0xf]
    %v96 = vld [vmem:[%s2 + $0x94] sm:$0xf]
    %v97 = vld [vmem:[%s2 + $0x98] sm:$0xf]
    %v98 = vld [vmem:[%s2 + $0x9c] sm:$0xf]
    %v99 = vld [vmem:[%s2 + $0xa0] sm:$0xf]
    %v100 = vld [vmem:[%s2 + $0xa4] sm:$0xf]
    %v101 = vld [vmem:[%s2 + $0xa8] sm:$0xf]
    %v102 = vld [vmem:[%s2 + $0xac] sm:$0xf]
    %v103 = vld [vmem:[%s2 + $0xb0] sm:$0xf]
    %v104 = vld [vmem:[%s2 + $0xb4] sm:$0xf]
    %v105 = vld [vmem:[%s2 + $0xb8] sm:$0xf]
    %v106 = vld [vmem:[%s2 + $0xbc] sm:$0xf]
    %v107 = vld [vmem:[%s2 + $0xc0] sm:$0xf]
    %v108 = vld [vmem:[%s2 + $0xc4] sm:$0xf]
    %v109 = vld [vmem:[%s2 + $0xc8] sm:$0xf]
    %v110 = vld [vmem:[%s2 + $0xcc] sm:$0xf]
    %v111 = vld [vmem:[%s2 + $0xd0] sm:$0xf]
    %v112 = vld [vmem:[%s2 + $0xd4] sm:$0xf]
    %v113 = vld [vmem:[%s2 + $0xd8] sm:$0xf]
    %v114 = vld [vmem:[%s2 + $0xdc] sm:$0xf]
    %v115 = vld [vmem:[%s2 + $0xe0] sm:$0xf]
    %v116 = vld [vmem:[%s2 + $0xe4] sm:$0xf]
    %v117 = vld [vmem:[%s2 + $0xe8] sm:$0xf]
    %v118 = vld [vmem:[%s2 + $0xec] sm:$0xf]
    %v119 = vld [vmem:[%s2 + $0xf0] sm:$0xf]
    %v120 = vld [vmem:[%s2 + $0xf4] sm:$0xf]
    %v121 = vld [vmem:[%s2 + $0xf8] sm:$0xf]
    %v122 = vld [vmem:[%s2 + $0xfc] sm:$0xf]
    %v123 = vld [vmem:[%s2 + $0x100] sm:$0xf]
    %v124 = vld [vmem:[%s2 + $0x104] sm:$0xf]
    %v125 = vld [vmem:[%s2 + $0x108] sm:$0xf]
    %v126 = vld [vmem:[%s2 + $0x10c] sm:$0xf]
    %v127 = vld [vmem:[%s2 + $0x110] sm:$0xf]
    %v128 = vld [vmem:[%s2 + $0x114] sm:$0xf]
    %v129 = vld [vmem:[%s2 + $0x118] sm:$0xf]
    %v130 = vld [vmem:[%s2 + $0x11c] sm:$0xf]
    %v131 = vld [vmem:[%s2 + $0x120] sm:$0xf]
    %v132 = vld [vmem:[%s2 + $0x124] sm:$0xf]
    %v133 = vld [vmem:[%s2 + $0x128] sm:$0xf]
    %v134 = vld [vmem:[%s2 + $0x12c] sm:$0xf]
    %v135 = vld [vmem:[%s2 + $0x130] sm:$0xf]
    %v136 = vld [vmem:[%s2 + $0x134] sm:$0xf]
    %v137 = vld [vmem:[%s2 + $0x138] sm:$0xf]
    %v138 = vld [vmem:[%s2 + $0x13c] sm:$0xf]
    %v139 = vld [vmem:[%s2 + $0x140] sm:$0xf]
    %v140 = vld [vmem:[%s2 + $0x144] sm:$0xf]
    %v141 = vld [vmem:[%s2 + $0x148] sm:$0xf]
    %v142 = vld [vmem:[%s2 + $0x14c] sm:$0xf]
    %v143 = vld [vmem:[%s2 + $0x150] sm:$0xf]
    %v144 = vld [vmem:[%s2 + $0x154] sm:$0xf]
    %v145 = vld [vmem:[%s2 + $0x158] sm:$0xf]
    %v146 = vld [vmem:[%s2 + $0x15c] sm:$0xf]
    %v147 = vld [vmem:[%s2 + $0x160] sm:$0xf]
    %v148 = vld [vmem:[%s2 + $0x164] sm:$0xf]
    %v149 = vld [vmem:[%s2 + $0x168] sm:$0xf]
    %v150 = vld [vmem:[%s2 + $0x16c] sm:$0xf]
    %v151 = vld [vmem:[%s2 + $0x170] sm:$0xf]
    %v152 = vld [vmem:[%s2 + $0x174] sm:$0xf]
    %v153 = vld [vmem:[%s2 + $0x178] sm:$0xf]
    %v154 = vld [vmem:[%s2 + $0x17c] sm:$0xf]
    %v155 = vld [vmem:[%s2 + $0x180] sm:$0xf]
    %v156 = vld [vmem:[%s2 + $0x184] sm:$0xf]
    %v157 = vld [vmem:[%s2 + $0x188] sm:$0xf]
    %v158 = vld [vmem:[%s2 + $0x18c] sm:$0xf]
    %v159 = vld [vmem:[%s2 + $0x190] sm:$0xf]
    %v160 = vld [vmem:[%s2 + $0x194] sm:$0xf]
    %v161 = vld [vmem:[%s2 + $0x198] sm:$0xf]
    %v162 = vld [vmem:[%s2 + $0x19c] sm:$0xf]
    %v163 = vld [vmem:[%s2 + $0x1a0] sm:$0xf]
    %v164 = vld [vmem:[%s2 + $0x1a4] sm:$0xf]
    %v165 = vld [vmem:[%s2 + $0x1a8] sm:$0xf]
    %v166 = vld [vmem:[%s2 + $0x1ac] sm:$0xf]
    %v167 = vld [vmem:[%s2 + $0x1b0] sm:$0xf]
    %v168 = vld [vmem:[%s2 + $0x1b4] sm:$0xf]
    %v169 = vld [vmem:[%s2 + $0x1b8] sm:$0xf]
    %v170 = vld [vmem:[%s2 + $0x1bc] sm:$0xf]
    %v171 = vld [vmem:[%s2 + $0x1c0] sm:$0xf]
    %v172 = vld [vmem:[%s2 + $0x1c4] sm:$0xf]
    %v173 = vld [vmem:[%s2 + $0x1c8] sm:$0xf]
    %v174 = vld [vmem:[%s2 + $0x1cc] sm:$0xf]
    %v175 = vld [vmem:[%s2 + $0x1d0] sm:$0xf]
    %v176 = vld [vmem:[%s2 + $0x1d4] sm:$0xf]
    %v177 = vld [vmem:[%s2 + $0x1d8] sm:$0xf]
    %v178 = vld [vmem:[%s2 + $0x1dc] sm:$0xf]
    %v179 = vld [vmem:[%s2 + $0x1e0] sm:$0xf]
    %v180 = vld [vmem:[%s2 + $0x1e4] sm:$0xf]
    %v181 = vld [vmem:[%s2 + $0x1e8] sm:$0xf]
    %v182 = vld [vmem:[%s2 + $0x1ec] sm:$0xf]
    %v183 = vld [vmem:[%s2 + $0x1f0] sm:$0xf]
    %v184 = vld [vmem:[%s2 + $0x1f4] sm:$0xf]
    %v185 = vld [vmem:[%s2 + $0x1f8] sm:$0xf]
    %v186 = vld [vmem:[%s2 + $0x1fc] sm:$0xf]
    %v187 = vld [vmem:[%s3] sm:$0x1]
    %v189 = vlaneseq
    %v190 = vshrl.u32 %v189, 7
    %v191 = vsub.s32 0, %v190
    %v192 = vrot.slane %v187, %v191
    %v195 = vcombine.high %v58, %v58
    %v197 = vunpack.c.l.s4 1966171168
    %v198 = vunpack.c.0.s8 %v197
    %v199 = vlaneseq
    %v200 = vshrl.u32 %v199, 7
    %v201 = vsub.s32 %v198, %v200
    %v202 = vrot.slane %v58, %v201
    %v204 = vunpack.c.l.s4 1966171168
    %v205 = vunpack.c.0.s8 %v204
    %v206 = vlaneseq
    %v207 = vshrl.u32 %v206, 7
    %v208 = vsub.s32 %v205, %v207
    %v209 = vrot.slane %v195, %v208
    %v210 = vcombine.high %v202, %v202
    %v211 = vcombine.high %v209, %v209
    %v213 = vunpack.c.l.s4 1966171168
    %v214 = vunpack.c.0.s8 %v213
    %v215 = vlaneseq
    %v216 = vshrl.u32 %v215, 7
    %v217 = vsub.s32 %v214, %v216
    %v218 = vrot.slane %v202, %v217
    %v220 = vunpack.c.l.s4 1966171168
    %v221 = vunpack.c.0.s8 %v220
    %v222 = vlaneseq
    %v223 = vshrl.u32 %v222, 7
    %v224 = vsub.s32 %v221, %v223
    %v225 = vrot.slane %v209, %v224
    %v227 = vunpack.c.l.s4 1966171168
    %v228 = vunpack.c.0.s8 %v227
    %v229 = vlaneseq
    %v230 = vshrl.u32 %v229, 7
    %v231 = vsub.s32 %v228, %v230
    %v232 = vrot.slane %v210, %v231
    %v234 = vunpack.c.l.s4 1966171168
    %v235 = vunpack.c.0.s8 %v234
    %v236 = vlaneseq
    %v237 = vshrl.u32 %v236, 7
    %v238 = vsub.s32 %v235, %v237
    %v239 = vrot.slane %v211, %v238
    %v240 = vcombine.high %v218, %v218
    %v241 = vcombine.high %v225, %v225
    %v242 = vcombine.high %v232, %v232
    %v243 = vcombine.high %v239, %v239
    %v380 = vunpack.c.l.b16 %v59
    %v381 = vunpack.c.l.b16 %v60
    %v382 = vunpack.c.l.b16 %v61
    %v383 = vunpack.c.l.b16 %v62
    %v384 = vunpack.c.l.b16 %v63
    %v385 = vunpack.c.l.b16 %v64
    %v386 = vunpack.c.l.b16 %v65
    %v387 = vunpack.c.l.b16 %v66
    %v388 = vunpack.c.l.b16 %v67
    %v389 = vunpack.c.l.b16 %v68
    %v390 = vunpack.c.l.b16 %v69
    %v391 = vunpack.c.l.b16 %v70
    %v392 = vunpack.c.l.b16 %v71
    %v393 = vunpack.c.l.b16 %v72
    %v394 = vunpack.c.l.b16 %v73
    %v395 = vunpack.c.l.b16 %v74
    %v396 = vunpack.c.l.b16 %v75
    %v397 = vunpack.c.l.b16 %v76
    %v398 = vunpack.c.l.b16 %v77
    %v399 = vunpack.c.l.b16 %v78
    %v400 = vunpack.c.l.b16 %v79
    %v401 = vunpack.c.l.b16 %v80
    %v402 = vunpack.c.l.b16 %v81
    %v403 = vunpack.c.l.b16 %v82
    %v404 = vunpack.c.l.b16 %v83
    %v405 = vunpack.c.l.b16 %v84
    %v406 = vunpack.c.l.b16 %v85
    %v407 = vunpack.c.l.b16 %v86
    %v408 = vunpack.c.l.b16 %v87
    %v409 = vunpack.c.l.b16 %v88
    %v410 = vunpack.c.l.b16 %v89
    %v411 = vunpack.c.l.b16 %v90
    %v412 = vunpack.c.l.b16 %v91
    %v413 = vunpack.c.l.b16 %v92
    %v414 = vunpack.c.l.b16 %v93
    %v415 = vunpack.c.l.b16 %v94
    %v416 = vunpack.c.l.b16 %v95
    %v417 = vunpack.c.l.b16 %v96
    %v418 = vunpack.c.l.b16 %v97
    %v419 = vunpack.c.l.b16 %v98
    %v420 = vunpack.c.l.b16 %v99
    %v421 = vunpack.c.l.b16 %v100
    %v422 = vunpack.c.l.b16 %v101
    %v423 = vunpack.c.l.b16 %v102
    %v424 = vunpack.c.l.b16 %v103
    %v425 = vunpack.c.l.b16 %v104
    %v426 = vunpack.c.l.b16 %v105
    %v427 = vunpack.c.l.b16 %v106
    %v428 = vunpack.c.l.b16 %v107
    %v429 = vunpack.c.l.b16 %v108
    %v430 = vunpack.c.l.b16 %v109
    %v431 = vunpack.c.l.b16 %v110
    %v432 = vunpack.c.l.b16 %v111
    %v433 = vunpack.c.l.b16 %v112
    %v434 = vunpack.c.l.b16 %v113
    %v435 = vunpack.c.l.b16 %v114
    %v436 = vunpack.c.l.b16 %v115
    %v437 = vunpack.c.l.b16 %v116
    %v438 = vunpack.c.l.b16 %v117
    %v439 = vunpack.c.l.b16 %v118
    %v440 = vunpack.c.l.b16 %v119
    %v441 = vunpack.c.l.b16 %v120
    %v442 = vunpack.c.l.b16 %v121
    %v443 = vunpack.c.l.b16 %v122
    %v444 = vunpack.c.l.b16 %v123
    %v445 = vunpack.c.l.b16 %v124
    %v446 = vunpack.c.l.b16 %v125
    %v447 = vunpack.c.l.b16 %v126
    %v448 = vunpack.c.l.b16 %v127
    %v449 = vunpack.c.l.b16 %v128
    %v450 = vunpack.c.l.b16 %v129
    %v451 = vunpack.c.l.b16 %v130
    %v452 = vunpack.c.l.b16 %v131
    %v453 = vunpack.c.l.b16 %v132
    %v454 = vunpack.c.l.b16 %v133
    %v455 = vunpack.c.l.b16 %v134
    %v456 = vunpack.c.l.b16 %v135
    %v457 = vunpack.c.l.b16 %v136
    %v458 = vunpack.c.l.b16 %v137
    %v459 = vunpack.c.l.b16 %v138
    %v460 = vunpack.c.l.b16 %v139
    %v461 = vunpack.c.l.b16 %v140
    %v462 = vunpack.c.l.b16 %v141
    %v463 = vunpack.c.l.b16 %v142
    %v464 = vunpack.c.l.b16 %v143
    %v465 = vunpack.c.l.b16 %v144
    %v466 = vunpack.c.l.b16 %v145
    %v467 = vunpack.c.l.b16 %v146
    %v468 = vunpack.c.l.b16 %v147
    %v469 = vunpack.c.l.b16 %v148
    %v470 = vunpack.c.l.b16 %v149
    %v471 = vunpack.c.l.b16 %v150
    %v472 = vunpack.c.l.b16 %v151
    %v473 = vunpack.c.l.b16 %v152
    %v474 = vunpack.c.l.b16 %v153
    %v475 = vunpack.c.l.b16 %v154
    %v476 = vunpack.c.l.b16 %v155
    %v477 = vunpack.c.l.b16 %v156
    %v478 = vunpack.c.l.b16 %v157
    %v479 = vunpack.c.l.b16 %v158
    %v480 = vunpack.c.l.b16 %v159
    %v481 = vunpack.c.l.b16 %v160
    %v482 = vunpack.c.l.b16 %v161
    %v483 = vunpack.c.l.b16 %v162
    %v484 = vunpack.c.l.b16 %v163
    %v485 = vunpack.c.l.b16 %v164
    %v486 = vunpack.c.l.b16 %v165
    %v487 = vunpack.c.l.b16 %v166
    %v488 = vunpack.c.l.b16 %v167
    %v489 = vunpack.c.l.b16 %v168
    %v490 = vunpack.c.l.b16 %v169
    %v491 = vunpack.c.l.b16 %v170
    %v492 = vunpack.c.l.b16 %v171
    %v493 = vunpack.c.l.b16 %v172
    %v494 = vunpack.c.l.b16 %v173
    %v495 = vunpack.c.l.b16 %v174
    %v496 = vunpack.c.l.b16 %v175
    %v497 = vunpack.c.l.b16 %v176
    %v498 = vunpack.c.l.b16 %v177
    %v499 = vunpack.c.l.b16 %v178
    %v500 = vunpack.c.l.b16 %v179
    %v501 = vunpack.c.l.b16 %v180
    %v502 = vunpack.c.l.b16 %v181
    %v503 = vunpack.c.l.b16 %v182
    %v504 = vunpack.c.l.b16 %v183
    %v505 = vunpack.c.l.b16 %v184
    %v506 = vunpack.c.l.b16 %v185
    %v507 = vunpack.c.l.b16 %v186
    %v508 = vpack.c.b16 %v381, %v380
    %v509 = vpack.c.b16 %v383, %v382
    %v510 = vpack.c.b16 %v385, %v384
    %v511 = vpack.c.b16 %v387, %v386
    %v512 = vpack.c.b16 %v389, %v388
    %v513 = vpack.c.b16 %v391, %v390
    %v514 = vpack.c.b16 %v393, %v392
    %v515 = vpack.c.b16 %v395, %v394
    %v516 = vpack.c.b16 %v397, %v396
    %v517 = vpack.c.b16 %v399, %v398
    %v518 = vpack.c.b16 %v401, %v400
    %v519 = vpack.c.b16 %v403, %v402
    %v520 = vpack.c.b16 %v405, %v404
    %v521 = vpack.c.b16 %v407, %v406
    %v522 = vpack.c.b16 %v409, %v408
    %v523 = vpack.c.b16 %v411, %v410
    %v524 = vpack.c.b16 %v413, %v412
    %v525 = vpack.c.b16 %v415, %v414
    %v526 = vpack.c.b16 %v417, %v416
    %v527 = vpack.c.b16 %v419, %v418
    %v528 = vpack.c.b16 %v421, %v420
    %v529 = vpack.c.b16 %v423, %v422
    %v530 = vpack.c.b16 %v425, %v424
    %v531 = vpack.c.b16 %v427, %v426
    %v532 = vpack.c.b16 %v429, %v428
    %v533 = vpack.c.b16 %v431, %v430
    %v534 = vpack.c.b16 %v433, %v432
    %v535 = vpack.c.b16 %v435, %v434
    %v536 = vpack.c.b16 %v437, %v436
    %v537 = vpack.c.b16 %v439, %v438
    %v538 = vpack.c.b16 %v441, %v440
    %v539 = vpack.c.b16 %v443, %v442
    %v540 = vpack.c.b16 %v445, %v444
    %v541 = vpack.c.b16 %v447, %v446
    %v542 = vpack.c.b16 %v449, %v448
    %v543 = vpack.c.b16 %v451, %v450
    %v544 = vpack.c.b16 %v453, %v452
    %v545 = vpack.c.b16 %v455, %v454
    %v546 = vpack.c.b16 %v457, %v456
    %v547 = vpack.c.b16 %v459, %v458
    %v548 = vpack.c.b16 %v461, %v460
    %v549 = vpack.c.b16 %v463, %v462
    %v550 = vpack.c.b16 %v465, %v464
    %v551 = vpack.c.b16 %v467, %v466
    %v552 = vpack.c.b16 %v469, %v468
    %v553 = vpack.c.b16 %v471, %v470
    %v554 = vpack.c.b16 %v473, %v472
    %v555 = vpack.c.b16 %v475, %v474
    %v556 = vpack.c.b16 %v477, %v476
    %v557 = vpack.c.b16 %v479, %v478
    %v558 = vpack.c.b16 %v481, %v480
    %v559 = vpack.c.b16 %v483, %v482
    %v560 = vpack.c.b16 %v485, %v484
    %v561 = vpack.c.b16 %v487, %v486
    %v562 = vpack.c.b16 %v489, %v488
    %v563 = vpack.c.b16 %v491, %v490
    %v564 = vpack.c.b16 %v493, %v492
    %v565 = vpack.c.b16 %v495, %v494
    %v566 = vpack.c.b16 %v497, %v496
    %v567 = vpack.c.b16 %v499, %v498
    %v568 = vpack.c.b16 %v501, %v500
    %v569 = vpack.c.b16 %v503, %v502
    %v570 = vpack.c.b16 %v505, %v504
    %v571 = vpack.c.b16 %v507, %v506
    %636 = vmatprep.subr.bf16.mxu0 0
    %637 = vmatpush1.bf16.msra.mxu0 %v508
    %638 = vmatprep.subr.bf16.mxu0 0
    %639 = vmatpush1.bf16.msra.mxu0 %v509
    %640 = vmatprep.subr.bf16.mxu0 0
    %641 = vmatpush1.bf16.msra.mxu0 %v510
    %642 = vmatprep.subr.bf16.mxu0 0
    %643 = vmatpush1.bf16.msra.mxu0 %v511
    %644 = vmatprep.subr.bf16.mxu0 0
    %645 = vmatpush1.bf16.msra.mxu0 %v512
    %646 = vmatprep.subr.bf16.mxu0 0
    %647 = vmatpush1.bf16.msra.mxu0 %v513
    %648 = vmatprep.subr.bf16.mxu0 0
    %649 = vmatpush1.bf16.msra.mxu0 %v514
    %650 = vmatprep.subr.bf16.mxu0 0
    %651 = vmatpush1.bf16.msra.mxu0 %v515
    %652 = vmatprep.subr.bf16.mxu0 0
    %653 = vmatpush1.bf16.msra.mxu0 %v516
    %654 = vmatprep.subr.bf16.mxu0 0
    %655 = vmatpush1.bf16.msra.mxu0 %v517
    %656 = vmatprep.subr.bf16.mxu0 0
    %657 = vmatpush1.bf16.msra.mxu0 %v518
    %658 = vmatprep.subr.bf16.mxu0 0
    %659 = vmatpush1.bf16.msra.mxu0 %v519
    %660 = vmatprep.subr.bf16.mxu0 0
    %661 = vmatpush1.bf16.msra.mxu0 %v520
    %662 = vmatprep.subr.bf16.mxu0 0
    %663 = vmatpush1.bf16.msra.mxu0 %v521
    %664 = vmatprep.subr.bf16.mxu0 0
    %665 = vmatpush1.bf16.msra.mxu0 %v522
    %666 = vmatprep.subr.bf16.mxu0 0
    %667 = vmatpush1.bf16.msra.mxu0 %v523
    %668 = vmatprep.mubr.bf16.mxu0 %v232
    %669 = vmatmul.mubr.bf16.gmra.mrb[0].mxu0 %v218
    %v670 = vpop.f32.mrb[0].mxu0
    %v671 = vadd.f32 %v192, %v670
    %v672 = vpop.f32.mrb[0].mxu0
    %v673 = vpop.f32.mrb[0].mxu0
    %v674 = vpop.f32.mrb[0].mxu0
    %675 = vdwg.mxu0
    %676 = vmatprep.subr.bf16.mxu0 0
    %677 = vmatpush1.bf16.msra.mxu0 %v524
    %678 = vmatprep.subr.bf16.mxu0 0
    %679 = vmatpush1.bf16.msra.mxu0 %v525
    %680 = vmatprep.subr.bf16.mxu0 0
    %681 = vmatpush1.bf16.msra.mxu0 %v526
    %682 = vmatprep.subr.bf16.mxu0 0
    %683 = vmatpush1.bf16.msra.mxu0 %v527
    %684 = vmatprep.subr.bf16.mxu0 0
    %685 = vmatpush1.bf16.msra.mxu0 %v528
    %686 = vmatprep.subr.bf16.mxu0 0
    %687 = vmatpush1.bf16.msra.mxu0 %v529
    %688 = vmatprep.subr.bf16.mxu0 0
    %689 = vmatpush1.bf16.msra.mxu0 %v530
    %690 = vmatprep.subr.bf16.mxu0 0
    %691 = vmatpush1.bf16.msra.mxu0 %v531
    %692 = vmatprep.subr.bf16.mxu0 0
    %693 = vmatpush1.bf16.msra.mxu0 %v532
    %694 = vmatprep.subr.bf16.mxu0 0
    %695 = vmatpush1.bf16.msra.mxu0 %v533
    %696 = vmatprep.subr.bf16.mxu0 0
    %697 = vmatpush1.bf16.msra.mxu0 %v534
    %698 = vmatprep.subr.bf16.mxu0 0
    %699 = vmatpush1.bf16.msra.mxu0 %v535
    %700 = vmatprep.subr.bf16.mxu0 0
    %701 = vmatpush1.bf16.msra.mxu0 %v536
    %702 = vmatprep.subr.bf16.mxu0 0
    %703 = vmatpush1.bf16.msra.mxu0 %v537
    %704 = vmatprep.subr.bf16.mxu0 0
    %705 = vmatpush1.bf16.msra.mxu0 %v538
    %706 = vmatprep.subr.bf16.mxu0 0
    %707 = vmatpush1.bf16.msra.mxu0 %v539
    %708 = vmatprep.mubr.bf16.mxu0 %v242
    %709 = vmatmul.mubr.bf16.gmra.mrb[0].mxu0 %v240
    %v710 = vpop.f32.mrb[0].mxu0
    %v711 = vadd.f32 %v671, %v710
    %v712 = vpop.f32.mrb[0].mxu0
    %v713 = vpop.f32.mrb[0].mxu0
    %v714 = vpop.f32.mrb[0].mxu0
    %715 = vdwg.mxu0
    %716 = vmatprep.subr.bf16.mxu0 0
    %717 = vmatpush1.bf16.msra.mxu0 %v540
    %718 = vmatprep.subr.bf16.mxu0 0
    %719 = vmatpush1.bf16.msra.mxu0 %v541
    %720 = vmatprep.subr.bf16.mxu0 0
    %721 = vmatpush1.bf16.msra.mxu0 %v542
    %722 = vmatprep.subr.bf16.mxu0 0
    %723 = vmatpush1.bf16.msra.mxu0 %v543
    %724 = vmatprep.subr.bf16.mxu0 0
    %725 = vmatpush1.bf16.msra.mxu0 %v544
    %726 = vmatprep.subr.bf16.mxu0 0
    %727 = vmatpush1.bf16.msra.mxu0 %v545
    %728 = vmatprep.subr.bf16.mxu0 0
    %729 = vmatpush1.bf16.msra.mxu0 %v546
    %730 = vmatprep.subr.bf16.mxu0 0
    %731 = vmatpush1.bf16.msra.mxu0 %v547
    %732 = vmatprep.subr.bf16.mxu0 0
    %733 = vmatpush1.bf16.msra.mxu0 %v548
    %734 = vmatprep.subr.bf16.mxu0 0
    %735 = vmatpush1.bf16.msra.mxu0 %v549
    %736 = vmatprep.subr.bf16.mxu0 0
    %737 = vmatpush1.bf16.msra.mxu0 %v550
    %738 = vmatprep.subr.bf16.mxu0 0
    %739 = vmatpush1.bf16.msra.mxu0 %v551
    %740 = vmatprep.subr.bf16.mxu0 0
    %741 = vmatpush1.bf16.msra.mxu0 %v552
    %742 = vmatprep.subr.bf16.mxu0 0
    %743 = vmatpush1.bf16.msra.mxu0 %v553
    %744 = vmatprep.subr.bf16.mxu0 0
    %745 = vmatpush1.bf16.msra.mxu0 %v554
    %746 = vmatprep.subr.bf16.mxu0 0
    %747 = vmatpush1.bf16.msra.mxu0 %v555
    %748 = vmatprep.mubr.bf16.mxu0 %v239
    %749 = vmatmul.mubr.bf16.gmra.mrb[0].mxu0 %v225
    %v750 = vpop.f32.mrb[0].mxu0
    %v751 = vadd.f32 %v711, %v750
    %v752 = vpop.f32.mrb[0].mxu0
    %v753 = vpop.f32.mrb[0].mxu0
    %v754 = vpop.f32.mrb[0].mxu0
    %755 = vdwg.mxu0
    %756 = vmatprep.subr.bf16.mxu0 0
    %757 = vmatpush1.bf16.msra.mxu0 %v556
    %758 = vmatprep.subr.bf16.mxu0 0
    %759 = vmatpush1.bf16.msra.mxu0 %v557
    %760 = vmatprep.subr.bf16.mxu0 0
    %761 = vmatpush1.bf16.msra.mxu0 %v558
    %762 = vmatprep.subr.bf16.mxu0 0
    %763 = vmatpush1.bf16.msra.mxu0 %v559
    %764 = vmatprep.subr.bf16.mxu0 0
    %765 = vmatpush1.bf16.msra.mxu0 %v560
    %766 = vmatprep.subr.bf16.mxu0 0
    %767 = vmatpush1.bf16.msra.mxu0 %v561
    %768 = vmatprep.subr.bf16.mxu0 0
    %769 = vmatpush1.bf16.msra.mxu0 %v562
    %770 = vmatprep.subr.bf16.mxu0 0
    %771 = vmatpush1.bf16.msra.mxu0 %v563
    %772 = vmatprep.subr.bf16.mxu0 0
    %773 = vmatpush1.bf16.msra.mxu0 %v564
    %774 = vmatprep.subr.bf16.mxu0 0
    %775 = vmatpush1.bf16.msra.mxu0 %v565
    %776 = vmatprep.subr.bf16.mxu0 0
    %777 = vmatpush1.bf16.msra.mxu0 %v566
    %778 = vmatprep.subr.bf16.mxu0 0
    %779 = vmatpush1.bf16.msra.mxu0 %v567
    %780 = vmatprep.subr.bf16.mxu0 0
    %781 = vmatpush1.bf16.msra.mxu0 %v568
    %782 = vmatprep.subr.bf16.mxu0 0
    %783 = vmatpush1.bf16.msra.mxu0 %v569
    %784 = vmatprep.subr.bf16.mxu0 0
    %785 = vmatpush1.bf16.msra.mxu0 %v570
    %786 = vmatprep.subr.bf16.mxu0 0
    %787 = vmatpush1.bf16.msra.mxu0 %v571
    %788 = vmatprep.mubr.bf16.mxu0 %v243
    %789 = vmatmul.mubr.bf16.gmra.mrb[0].mxu0 %v241
    %v790 = vpop.f32.mrb[0].mxu0
    %v791 = vadd.f32 %v751, %v790
    %v792 = vpop.f32.mrb[0].mxu0
    %v793 = vpop.f32.mrb[0].mxu0
    %v794 = vpop.f32.mrb[0].mxu0
    %795 = vdwg.mxu0
    %v796 = vmax.f32 %v791, 0.0
    %v797 = vpack.c.bf16 %v796, %v796
    %v798 = vld [vmem:[%s50] sm:$0xf]
    %v799 = vld [vmem:[%s50 + $0x4] sm:$0xf]
    %v800 = vld [vmem:[%s50 + $0x8] sm:$0xf]
    %v801 = vld [vmem:[%s50 + $0xc] sm:$0xf]
    %v802 = vld [vmem:[%s55] sm:$0x1]
    %v804 = vlaneseq
    %v805 = vshrl.u32 %v804, 7
    %v806 = vsub.s32 0, %v805
    %v807 = vrot.slane %v802, %v806
    %v813 = vunpack.c.l.b16 %v798
    %v814 = vunpack.c.l.b16 %v799
    %v815 = vunpack.c.l.b16 %v800
    %v816 = vunpack.c.l.b16 %v801
    %v817 = vpack.c.b16 %v814, %v813
    %v818 = vpack.c.b16 %v816, %v815
    %vm821 = vcmask 261120
    %v823 = vsel %vm821, %v797, 0
    %825 = vmatprep.subr.bf16.mxu0 0
    %826 = vmatpush1.bf16.msra.mxu0 %v817
    %827 = vmatprep.subr.bf16.mxu0 0
    %828 = vmatpush1.bf16.msra.mxu0 %v818
    %829 = vmatprep.subr.bf16.mxu0 0
    %830 = vmatpush1.bf16.msra.mxu0 0
    %831 = vmatprep.subr.bf16.mxu0 0
    %832 = vmatpush1.bf16.msra.mxu0 0
    %833 = vmatprep.subr.bf16.mxu0 0
    %834 = vmatpush1.bf16.msra.mxu0 0
    %835 = vmatprep.subr.bf16.mxu0 0
    %836 = vmatpush1.bf16.msra.mxu0 0
    %837 = vmatprep.subr.bf16.mxu0 0
    %838 = vmatpush1.bf16.msra.mxu0 0
    %839 = vmatprep.subr.bf16.mxu0 0
    %840 = vmatpush1.bf16.msra.mxu0 0
    %841 = vmatprep.subr.bf16.mxu0 0
    %842 = vmatpush1.bf16.msra.mxu0 0
    %843 = vmatprep.subr.bf16.mxu0 0
    %844 = vmatpush1.bf16.msra.mxu0 0
    %845 = vmatprep.subr.bf16.mxu0 0
    %846 = vmatpush1.bf16.msra.mxu0 0
    %847 = vmatprep.subr.bf16.mxu0 0
    %848 = vmatpush1.bf16.msra.mxu0 0
    %849 = vmatprep.subr.bf16.mxu0 0
    %850 = vmatpush1.bf16.msra.mxu0 0
    %851 = vmatprep.subr.bf16.mxu0 0
    %852 = vmatpush1.bf16.msra.mxu0 0
    %853 = vmatprep.subr.bf16.mxu0 0
    %854 = vmatpush1.bf16.msra.mxu0 0
    %855 = vmatprep.subr.bf16.mxu0 0
    %856 = vmatpush1.bf16.msra.mxu0 0
    %857 = vmatprep.mubr.bf16.mxu0 0
    %858 = vmatmul.mubr.bf16.gmra.mrb[0].mxu0 %v823
    %v859 = vpop.f32.mrb[0].mxu0
    %v860 = vadd.f32 %v807, %v859
    %v861 = vpop.f32.mrb[0].mxu0
    %v862 = vpop.f32.mrb[0].mxu0
    %v863 = vpop.f32.mrb[0].mxu0
    %864 = vdwg.mxu0
    %vm865 = vcmask 9216
    %866 = vst.msk [vmem:[#allocation4] sm:$0x3] %vm865, %v860
    // Predicated region
    $region22: #{mlp_multi_forward.1} parent=1 // pred_check
      _
    $region23: #{mlp_multi_forward.1} parent=1 // pred_check_branch
      %868 = sbr.rel (0) target = $region25
    $region24: #{mlp_multi_forward.1} parent=1 // pred_region
      %s870 = ssub.s32 32, 32
      %871 = vsyncadd [#allocation5], %s870
      %s873 = sshll.u32 [#allocation4], 4
      %s874 = int_to_ptr.vmem [resolvable:$true] %s873
      %876 = dma.vmem_to_hbm [thread:$0]  %s874, 32, %s6, [#allocation5]
    $region25: #{mlp_multi_forward.1} parent=1 // pred_fallthru
      _
    // Predicated region
    $region26: #{mlp_multi_forward.1} parent=1 // pred_check
      _
    $region27: #{mlp_multi_forward.1} parent=1 // pred_check_branch
      %878 = sbr.rel (0) target = $region29
    $region28: #{mlp_multi_forward.1} parent=1 // pred_region
      %879 = dma.done [#allocation5], 32
    $region29: #{mlp_multi_forward.1} parent=1 // pred_fallthru
      _
    %880 = vsyncpa [#allocation5], 1

</llo_original>
